<compile_context>
chip_gen: v7x
topology: tpu7x:2x2x1
jax: 0.10.0
libtpu: 0.0.40
codegen_flags: <defaults>
</compile_context>

<pallas_src>
import jax
import jax.numpy as jnp
import numpy as np
from jax.experimental import pallas as pl
from jax.experimental.pallas import tpu as pltpu

# ----------------------------- problem sizes --------------------------------
B, C_IN, H, W = 2, 4, 16, 16
C_OUT = 8                   # conv output channels
K = 3                       # conv kernel (padding=1, stride=1)
HIDDEN = 32                 # mlp hidden
N_OUT = 10                  # mlp output classes
HW = H * W                  # 256 (multiple of 128 -> lane-aligned slices)
CKK = C_IN * K * K          # 36
CKK_PAD = 40                # 8-aligned contraction dim; row CKK holds the ones-row (bias)
LANES = 128

# packed MLP parameter buffer layout (rows x 128 lanes), all 8-row aligned
W1_ROW = 0                  # rows 0:8    -> w1   (cols 0:HIDDEN)
B1_ROW = 8                  # row  8      -> b1   (cols 0:HIDDEN)
B2_ROW = 16                 # row  16     -> b2   (cols 0:N_OUT)
W2_ROW = 24                 # rows 24:152 -> w2 zero-padded to [128, 128]
PACK_ROWS = W2_ROW + LANES  # 152


# ------------------------------ Pallas kernel -------------------------------
def combined_kernel(patches_ref, wcb_ref, mlp_ref, out_ref):
    # conv (+bias via ones-row) as lane-dense matmul: [8,40] @ [40,512] -> [8,512]
    conv = jnp.dot(wcb_ref[...], patches_ref[...],
                   preferred_element_type=jnp.float32)
    conv = jnp.maximum(conv, 0.0)                         # ReLU

    # global average pool: per-batch lane reduction (XLU), tiny transpose after
    featT = jnp.concatenate(
        [jnp.sum(conv[:, b * HW:(b + 1) * HW], axis=1, keepdims=True)
         for b in range(B)], axis=1)                      # [C_OUT, B]
    feat = featT.T * (1.0 / HW)                           # [B, C_OUT]

    # MLP from the packed, 128-lane-dense parameter buffer
    w1p = mlp_ref[W1_ROW:W1_ROW + C_OUT, :]               # [8, 128]  (cols>=32 are 0)
    b1p = mlp_ref[B1_ROW:B1_ROW + 1, :]                   # [1, 128]
    b2p = mlp_ref[B2_ROW:B2_ROW + 1, :]                   # [1, 128]
    w2p = mlp_ref[W2_ROW:W2_ROW + LANES, :]               # [128, 128] (rows>=32 are 0)

    h = jnp.maximum(jnp.dot(feat, w1p, preferred_element_type=jnp.float32) + b1p,
                    0.0)                                  # [B, 128]
    out_ref[...] = (jnp.dot(h, w2p, preferred_element_type=jnp.float32)
                    + b2p)                                # [B, 128] lane-dense


# ------------------------------- jitted wrapper ------------------------------
@jax.jit
def combined_forward(x, wc, bc, w1, b1, w2, b2):
    """x: NCHW float32 [B, C_IN, H, W] -> logits [B, N_OUT]."""
    # im2col (padding=1, stride=1); row order (c, kh, kw), col order (b, h, w)
    xp = jnp.pad(x, ((0, 0), (0, 0), (1, 1), (1, 1)))
    cols = [xp[:, :, kh:kh + H, kw:kw + W] for kh in range(K) for kw in range(K)]
    patches = jnp.stack(cols, axis=2)                     # [B, C, K*K, H, W]
    patches_T = jnp.transpose(patches, (1, 2, 0, 3, 4)).reshape(CKK, B * HW)
    patches_T = patches_T.astype(jnp.float32)

    ones_row = jnp.ones((1, B * HW), jnp.float32)         # conv-bias fold
    pad_rows = jnp.zeros((CKK_PAD - CKK - 1, B * HW), jnp.float32)
    patches_full = jnp.concatenate([patches_T, ones_row, pad_rows], axis=0)  # [40, 512]

    # conv weight [C_OUT, C_IN, K, K] -> [8, 40] with bias column at col CKK
    wc_mat = wc.reshape(C_OUT, CKK).astype(jnp.float32)
    wcb = jnp.concatenate(
        [wc_mat, bc.reshape(C_OUT, 1).astype(jnp.float32),
         jnp.zeros((C_OUT, CKK_PAD - CKK - 1), jnp.float32)], axis=1)        # [8, 40]

    # packed MLP parameters, zero-padded to 128 lanes
    pack = jnp.zeros((PACK_ROWS, LANES), jnp.float32)
    pack = pack.at[W1_ROW:W1_ROW + C_OUT, 0:HIDDEN].set(w1.astype(jnp.float32))
    pack = pack.at[B1_ROW, 0:HIDDEN].set(b1.astype(jnp.float32))
    pack = pack.at[B2_ROW, 0:N_OUT].set(b2.astype(jnp.float32))
    pack = pack.at[W2_ROW:W2_ROW + HIDDEN, 0:N_OUT].set(w2.astype(jnp.float32))

    vmem = pl.BlockSpec(memory_space=pltpu.MemorySpace.VMEM)
    out_pad = pl.pallas_call(
        combined_kernel,
        out_shape=jax.ShapeDtypeStruct((B, LANES), jnp.float32),
        in_specs=[vmem, vmem, vmem],
        out_specs=vmem,
    )(patches_full, wcb, pack)
    return out_pad[:, :N_OUT]


# ------------------------- pure-JAX reference (check) -----------------------
def reference_forward(x, wc, bc, w1, b1, w2, b2):
    conv = jax.lax.conv_general_dilated(
        x, wc, window_strides=(1, 1), padding=((1, 1), (1, 1)),
        dimension_numbers=("NCHW", "OIHW", "NCHW"))
    conv = jnp.maximum(conv + bc.reshape(1, C_OUT, 1, 1), 0.0)
    feat = conv.mean(axis=(2, 3))                          # [B, C_OUT]
    h = jnp.maximum(feat @ w1 + b1, 0.0)
    return h @ w2 + b2


# ----------------------------------- main ------------------------------------
if __name__ == "__main__":
    key = jax.random.PRNGKey(0)
    kx, kwc, kbc, kw1, kb1, kw2, kb2 = jax.random.split(key, 7)

    x = jax.random.normal(kx, (B, C_IN, H, W), dtype=jnp.float32)

    # deterministic synthetic parameters
    wc = 0.1 * jax.random.normal(kwc, (C_OUT, C_IN, K, K), dtype=jnp.float32)
    bc = 0.1 * jax.random.normal(kbc, (C_OUT,), dtype=jnp.float32)
    w1 = 0.1 * jax.random.normal(kw1, (C_OUT, HIDDEN), dtype=jnp.float32)
    b1 = 0.1 * jax.random.normal(kb1, (HIDDEN,), dtype=jnp.float32)
    w2 = 0.1 * jax.random.normal(kw2, (HIDDEN, N_OUT), dtype=jnp.float32)
    b2 = 0.1 * jax.random.normal(kb2, (N_OUT,), dtype=jnp.float32)

    out = jax.block_until_ready(combined_forward(x, wc, bc, w1, b1, w2, b2))
    ref = jax.block_until_ready(reference_forward(x, wc, bc, w1, b1, w2, b2))
    np.testing.assert_allclose(np.asarray(out), np.asarray(ref),
                               rtol=1e-4, atol=1e-4)
    print("KERNEL_OK")
</pallas_src>

<mosaic_0001>
module attributes {stable_mosaic.version = 11 : i64} {
  func.func @combined_kernel(%arg0: memref<40x512xf32, #tpu.memory_space<vmem>>, %arg1: memref<8x40xf32, #tpu.memory_space<vmem>>, %arg2: memref<152x128xf32, #tpu.memory_space<vmem>>, %arg3: memref<2x128xf32, #tpu.memory_space<vmem>>) attributes {dimension_semantics = [], scalar_prefetch = 0 : i64, scratch_operands = 0 : i64, tpu.core_type = #tpu.core_type<tc>} {
    %c0 = arith.constant 0 : index
    %c0_0 = arith.constant 0 : index
    %0 = vector.load %arg1[%c0, %c0_0] : memref<8x40xf32, #tpu.memory_space<vmem>>, vector<8x40xf32>
    %c0_1 = arith.constant 0 : index
    %c0_2 = arith.constant 0 : index
    %1 = vector.load %arg0[%c0_1, %c0_2] : memref<40x512xf32, #tpu.memory_space<vmem>>, vector<40x512xf32>
    %cst = arith.constant dense<0.000000e+00> : vector<8x512xf32>
    %2 = tpu.matmul %0, %1, %cst {dimension_numbers = #tpu.dot_dimension_numbers<[1], [0], [0], [1], [0, 0, 1, 1], [], []>} : vector<8x40xf32>, vector<40x512xf32>, vector<8x512xf32> -> vector<8x512xf32>
    %cst_3 = arith.constant 0.000000e+00 : f32
    %3 = vector.broadcast %cst_3 : f32 to vector<8x512xf32>
    %4 = arith.maximumf %2, %3 : vector<8x512xf32>
    %5 = vector.extract_strided_slice %4 {offsets = [0, 0], sizes = [8, 256], strides = [1, 1]} : vector<8x512xf32> to vector<8x256xf32>
    %cst_4 = arith.constant dense<0.000000e+00> : vector<8xf32>
    %6 = vector.multi_reduction <add>, %5, %cst_4 [1] : vector<8x256xf32> to vector<8xf32>
    %7 = vector.shape_cast %6 : vector<8xf32> to vector<8x1xf32>
    %8 = vector.extract_strided_slice %4 {offsets = [0, 256], sizes = [8, 256], strides = [1, 1]} : vector<8x512xf32> to vector<8x256xf32>
    %cst_5 = arith.constant dense<0.000000e+00> : vector<8xf32>
    %9 = vector.multi_reduction <add>, %8, %cst_5 [1] : vector<8x256xf32> to vector<8xf32>
    %10 = vector.shape_cast %9 : vector<8xf32> to vector<8x1xf32>
    %11 = tpu.concatenate %7, %10 in 1 : vector<8x1xf32>, vector<8x1xf32> -> vector<8x2xf32>
    %12 = tpu.transpose %11, [1, 0] : vector<8x2xf32> -> vector<2x8xf32>
    %cst_6 = arith.constant 3.906250e-03 : f32
    %13 = vector.broadcast %cst_6 : f32 to vector<2x8xf32>
    %14 = arith.mulf %12, %13 : vector<2x8xf32>
    %c0_7 = arith.constant 0 : index
    %c0_8 = arith.constant 0 : index
    %15 = vector.load %arg2[%c0_7, %c0_8] : memref<152x128xf32, #tpu.memory_space<vmem>>, vector<8x128xf32>
    %c8 = arith.constant 8 : index
    %c0_9 = arith.constant 0 : index
    %16 = vector.load %arg2[%c8, %c0_9] : memref<152x128xf32, #tpu.memory_space<vmem>>, vector<1x128xf32>
    %c16 = arith.constant 16 : index
    %c0_10 = arith.constant 0 : index
    %17 = vector.load %arg2[%c16, %c0_10] : memref<152x128xf32, #tpu.memory_space<vmem>>, vector<1x128xf32>
    %c24 = arith.constant 24 : index
    %c0_11 = arith.constant 0 : index
    %18 = vector.load %arg2[%c24, %c0_11] : memref<152x128xf32, #tpu.memory_space<vmem>>, vector<128x128xf32>
    %cst_12 = arith.constant dense<0.000000e+00> : vector<2x128xf32>
    %19 = tpu.matmul %14, %15, %cst_12 {dimension_numbers = #tpu.dot_dimension_numbers<[1], [0], [0], [1], [0, 0, 1, 1], [], []>} : vector<2x8xf32>, vector<8x128xf32>, vector<2x128xf32> -> vector<2x128xf32>
    %20 = vector.broadcast %16 : vector<1x128xf32> to vector<2x128xf32>
    %21 = arith.addf %19, %20 : vector<2x128xf32>
    %cst_13 = arith.constant 0.000000e+00 : f32
    %22 = vector.broadcast %cst_13 : f32 to vector<2x128xf32>
    %23 = arith.maximumf %21, %22 : vector<2x128xf32>
    %cst_14 = arith.constant dense<0.000000e+00> : vector<2x128xf32>
    %24 = tpu.matmul %23, %18, %cst_14 {dimension_numbers = #tpu.dot_dimension_numbers<[1], [0], [0], [1], [0, 0, 1, 1], [], []>} : vector<2x128xf32>, vector<128x128xf32>, vector<2x128xf32> -> vector<2x128xf32>
    %25 = vector.broadcast %17 : vector<1x128xf32> to vector<2x128xf32>
    %26 = arith.addf %24, %25 : vector<2x128xf32>
    %c0_15 = arith.constant 0 : index
    %c0_16 = arith.constant 0 : index
    %27 = vector.load %arg3[%c0_15, %c0_16] : memref<2x128xf32, #tpu.memory_space<vmem>>, vector<2x128xf32>
    tpu.vector_store %arg3[%c0_15, %c0_16], %26 {strides = array<i32>} : memref<2x128xf32, #tpu.memory_space<vmem>>, vector<2x128xf32>,
    return
  }
}

</mosaic_0001>

<llo_original>
// kernel: combined_forward.1
$region0: #{combined_forward.1}
  #allocation0 [shape = 'u32[]', space=smem, size = 0x4, offset = 0x4, fixed_abs, tag = 'smem constant byte address 0x4 - core index']
  #allocation1 [shape = 'u32[144,128]{1,0:T(1,128)}', space=vmem, size = 0x12000, scoped, tag = 'internal scratch']
  %s0 = inlined_call_operand.vmem [shape: f32[40,512], index: 0, kind: input, shape index: {}]
  %s1 = inlined_call_operand.vmem [shape: f32[8,40], index: 1, kind: input, shape index: {}]
  %s2 = inlined_call_operand.vmem [shape: f32[152,128], index: 2, kind: input, shape index: {}]
  %s3 = inlined_call_operand.hbm [shape: f32[2,128], index: 3, kind: output, shape index: {}]
  %s4 = sld [smem:[#allocation0]]
  $region22: #{combined_forward.1} parent=0
    _
  %s6 = ssub.s32 1, %s4
  %s7 = scalar_select 0, %s6, %s4
  $region1: #{combined_forward.1} parent=0
    #allocation2 [shape = 'u8[1024]{0}', space=vmem, size = 0x400, scoped, tag = 'output window, operand 0, single buffered']
    #allocation3 [shape = 's32[1]{0}', space=sflag, size = 0x4, scoped, tag = 'scoped memory for combined_forward.1']
    %8 = vsyncpa [#allocation3], 0
    // Predicated region
    $region2: #{combined_forward.1} parent=1 // pred_check
      _
    $region3: #{combined_forward.1} parent=1 // pred_check_branch
      %10 = sbr.rel (0) target = $region5
    $region4: #{combined_forward.1} parent=1 // pred_region
      _
    $region5: #{combined_forward.1} parent=1 // pred_fallthru
      _
    // Predicated region
    $region6: #{combined_forward.1} parent=1 // pred_check
      _
    $region7: #{combined_forward.1} parent=1 // pred_check_branch
      %12 = sbr.rel (0) target = $region9
    $region8: #{combined_forward.1} parent=1 // pred_region
      _
    $region9: #{combined_forward.1} parent=1 // pred_fallthru
      _
    // Predicated region
    $region10: #{combined_forward.1} parent=1 // pred_check
      _
    $region11: #{combined_forward.1} parent=1 // pred_check_branch
      %14 = sbr.rel (0) target = $region13
    $region12: #{combined_forward.1} parent=1 // pred_region
      _
    $region13: #{combined_forward.1} parent=1 // pred_fallthru
      _
    %v15 = vld [vmem:[%s1] sm:$0xff]
    %v16 = vld [vmem:[%s0] sm:$0xff]
    %v17 = vld [vmem:[%s0 + $0x8] sm:$0xff]
    %v18 = vld [vmem:[%s0 + $0x10] sm:$0xff]
    %v19 = vld [vmem:[%s0 + $0x18] sm:$0xff]
    %v20 = vld [vmem:[%s0 + $0x20] sm:$0xff]
    %v21 = vld [vmem:[%s0 + $0x28] sm:$0xff]
    %v22 = vld [vmem:[%s0 + $0x30] sm:$0xff]
    %v23 = vld [vmem:[%s0 + $0x38] sm:$0xff]
    %v24 = vld [vmem:[%s0 + $0x40] sm:$0xff]
    %v25 = vld [vmem:[%s0 + $0x48] sm:$0xff]
    %v26 = vld [vmem:[%s0 + $0x50] sm:$0xff]
    %v27 = vld [vmem:[%s0 + $0x58] sm:$0xff]
    %v28 = vld [vmem:[%s0 + $0x60] sm:$0xff]
    %v29 = vld [vmem:[%s0 + $0x68] sm:$0xff]
    %v30 = vld [vmem:[%s0 + $0x70] sm:$0xff]
    %v31 = vld [vmem:[%s0 + $0x78] sm:$0xff]
    %v32 = vld [vmem:[%s0 + $0x80] sm:$0xff]
    %v33 = vld [vmem:[%s0 + $0x88] sm:$0xff]
    %v34 = vld [vmem:[%s0 + $0x90] sm:$0xff]
    %v35 = vld [vmem:[%s0 + $0x98] sm:$0xff]
    %vm36 = vcmask 326656
    %v38 = vsel %vm36, %v15, 0
    %40 = vmatprep.subr.mxu0 %v17
    %41 = vmatpush1.msra.mxu0 %v16
    %42 = vmatprep.subr.mxu0 %v21
    %43 = vmatpush1.msra.mxu0 %v20
    %44 = vmatprep.subr.mxu0 %v25
    %45 = vmatpush1.msra.mxu0 %v24
    %46 = vmatprep.subr.mxu0 %v29
    %47 = vmatpush1.msra.mxu0 %v28
    %48 = vmatprep.subr.mxu0 %v33
    %49 = vmatpush1.msra.mxu0 %v32
    %50 = vmatprep.subr.mxu0 0.0
    %51 = vmatpush1.msra.mxu0 0.0
    %52 = vmatprep.subr.mxu0 0.0
    %53 = vmatpush1.msra.mxu0 0.0
    %54 = vmatprep.subr.mxu0 0.0
    %55 = vmatpush1.msra.mxu0 0.0
    %56 = vmatprep.subr.mxu0 0.0
    %57 = vmatpush1.msra.mxu0 0.0
    %58 = vmatprep.subr.mxu0 0.0
    %59 = vmatpush1.msra.mxu0 0.0
    %60 = vmatprep.subr.mxu0 0.0
    %61 = vmatpush1.msra.mxu0 0.0
    %62 = vmatprep.subr.mxu0 0.0
    %63 = vmatpush1.msra.mxu0 0.0
    %64 = vmatprep.subr.mxu0 0.0
    %65 = vmatpush1.msra.mxu0 0.0
    %66 = vmatprep.subr.mxu0 0.0
    %67 = vmatpush1.msra.mxu0 0.0
    %68 = vmatprep.subr.mxu0 0.0
    %69 = vmatpush1.msra.mxu0 0.0
    %70 = vmatprep.subr.mxu0 0.0
    %71 = vmatpush1.msra.mxu0 0.0
    %72 = vmatprep.subr.mxu0 0.0
    %73 = vmatpush1.msra.mxu0 0.0
    %74 = vmatprep.subr.mxu0 0.0
    %75 = vmatpush1.msra.mxu0 0.0
    %76 = vmatprep.subr.mxu0 0.0
    %77 = vmatpush1.msra.mxu0 0.0
    %78 = vmatprep.subr.mxu0 0.0
    %79 = vmatpush1.msra.mxu0 0.0
    %80 = vmatprep.subr.mxu0 0.0
    %81 = vmatpush1.msra.mxu0 0.0
    %82 = vmatprep.subr.mxu0 0.0
    %83 = vmatpush1.msra.mxu0 0.0
    %84 = vmatprep.subr.mxu0 0.0
    %85 = vmatpush1.msra.mxu0 0.0
    %86 = vmatprep.subr.mxu0 0.0
    %87 = vmatpush1.msra.mxu0 0.0
    %88 = vmatprep.subr.mxu0 0.0
    %89 = vmatpush1.msra.mxu0 0.0
    %90 = vmatprep.subr.mxu0 0.0
    %91 = vmatpush1.msra.mxu0 0.0
    %92 = vmatprep.subr.mxu0 0.0
    %93 = vmatpush1.msra.mxu0 0.0
    %94 = vmatprep.subr.mxu0 0.0
    %95 = vmatpush1.msra.mxu0 0.0
    %96 = vmatprep.subr.mxu0 0.0
    %97 = vmatpush1.msra.mxu0 0.0
    %98 = vmatprep.subr.mxu0 0.0
    %99 = vmatpush1.msra.mxu0 0.0
    %100 = vmatprep.subr.mxu0 0.0
    %101 = vmatpush1.msra.mxu0 0.0
    %102 = vmatprep.subr.mxu0 0.0
    %103 = vmatpush1.msra.mxu0 0.0
    %104 = vmatprep.mubr.f32.mxu0 0.0
    %105 = vmatmul.mubr.f32.gmra.mrb[0].mxu0 %v38
    %v106 = vpop.f32.mrb[0].mxu0
    %v107 = vadd.f32 0.0, %v106
    %v108 = vpop.f32.mrb[0].mxu0
    %v109 = vadd.f32 0.0, %v108
    %110 = vdwg.mxu0
    %111 = vmatprep.subr.mxu0 %v19
    %112 = vmatpush1.msra.mxu0 %v18
    %113 = vmatprep.subr.mxu0 %v23
    %114 = vmatpush1.msra.mxu0 %v22
    %115 = vmatprep.subr.mxu0 %v27
    %116 = vmatpush1.msra.mxu0 %v26
    %117 = vmatprep.subr.mxu0 %v31
    %118 = vmatpush1.msra.mxu0 %v30
    %119 = vmatprep.subr.mxu0 %v35
    %120 = vmatpush1.msra.mxu0 %v34
    %121 = vmatprep.subr.mxu0 0.0
    %122 = vmatpush1.msra.mxu0 0.0
    %123 = vmatprep.subr.mxu0 0.0
    %124 = vmatpush1.msra.mxu0 0.0
    %125 = vmatprep.subr.mxu0 0.0
    %126 = vmatpush1.msra.mxu0 0.0
    %127 = vmatprep.subr.mxu0 0.0
    %128 = vmatpush1.msra.mxu0 0.0
    %129 = vmatprep.subr.mxu0 0.0
    %130 = vmatpush1.msra.mxu0 0.0
    %131 = vmatprep.subr.mxu0 0.0
    %132 = vmatpush1.msra.mxu0 0.0
    %133 = vmatprep.subr.mxu0 0.0
    %134 = vmatpush1.msra.mxu0 0.0
    %135 = vmatprep.subr.mxu0 0.0
    %136 = vmatpush1.msra.mxu0 0.0
    %137 = vmatprep.subr.mxu0 0.0
    %138 = vmatpush1.msra.mxu0 0.0
    %139 = vmatprep.subr.mxu0 0.0
    %140 = vmatpush1.msra.mxu0 0.0
    %141 = vmatprep.subr.mxu0 0.0
    %142 = vmatpush1.msra.mxu0 0.0
    %143 = vmatprep.subr.mxu0 0.0
    %144 = vmatpush1.msra.mxu0 0.0
    %145 = vmatprep.subr.mxu0 0.0
    %146 = vmatpush1.msra.mxu0 0.0
    %147 = vmatprep.subr.mxu0 0.0
    %148 = vmatpush1.msra.mxu0 0.0
    %149 = vmatprep.subr.mxu0 0.0
    %150 = vmatpush1.msra.mxu0 0.0
    %151 = vmatprep.subr.mxu0 0.0
    %152 = vmatpush1.msra.mxu0 0.0
    %153 = vmatprep.subr.mxu0 0.0
    %154 = vmatpush1.msra.mxu0 0.0
    %155 = vmatprep.subr.mxu0 0.0
    %156 = vmatpush1.msra.mxu0 0.0
    %157 = vmatprep.subr.mxu0 0.0
    %158 = vmatpush1.msra.mxu0 0.0
    %159 = vmatprep.subr.mxu0 0.0
    %160 = vmatpush1.msra.mxu0 0.0
    %161 = vmatprep.subr.mxu0 0.0
    %162 = vmatpush1.msra.mxu0 0.0
    %163 = vmatprep.subr.mxu0 0.0
    %164 = vmatpush1.msra.mxu0 0.0
    %165 = vmatprep.subr.mxu0 0.0
    %166 = vmatpush1.msra.mxu0 0.0
    %167 = vmatprep.subr.mxu0 0.0
    %168 = vmatpush1.msra.mxu0 0.0
    %169 = vmatprep.subr.mxu0 0.0
    %170 = vmatpush1.msra.mxu0 0.0
    %171 = vmatprep.subr.mxu0 0.0
    %172 = vmatpush1.msra.mxu0 0.0
    %173 = vmatprep.subr.mxu0 0.0
    %174 = vmatpush1.msra.mxu0 0.0
    %175 = vmatprep.mubr.f32.mxu0 0.0
    %176 = vmatmul.mubr.f32.gmra.mrb[0].mxu0 %v38
    %v177 = vpop.f32.mrb[0].mxu0
    %v178 = vadd.f32 0.0, %v177
    %v179 = vpop.f32.mrb[0].mxu0
    %v180 = vadd.f32 0.0, %v179
    %181 = vdwg.mxu0
    %v182 = vmax.f32 %v107, 0.0
    %v183 = vmax.f32 %v109, 0.0
    %v184 = vmax.f32 %v178, 0.0
    %v185 = vmax.f32 %v180, 0.0
    %v186 = vadd.f32 %v182, %v183
    %187 = vadd.xlane.f32.xlu0 %v186
    %v188 = vpop.xlane.xlu0 %187
    %v189 = vadd.f32 %v184, %v185
    %190 = vadd.xlane.f32.xlu0 %v189
    %v191 = vpop.xlane.xlu0 %190
    %vm192 = vcmask 7168
    %v193 = vsel %vm192, %v188, %v191
    %194 = vxpose.xlu0.b32.start [1/16] %v193, 128
    %195 = vxpose.xlu0.b32.cont [2/16] 0.0, 128
    %196 = vxpose.xlu0.b32.cont [3/16] 0.0, 128
    %197 = vxpose.xlu0.b32.cont [4/16] 0.0, 128
    %198 = vxpose.xlu0.b32.cont [5/16] 0.0, 128
    %199 = vxpose.xlu0.b32.cont [6/16] 0.0, 128
    %200 = vxpose.xlu0.b32.cont [7/16] 0.0, 128
    %201 = vxpose.xlu0.b32.cont [8/16] 0.0, 128
    %202 = vxpose.xlu0.b32.cont [9/16] 0.0, 128
    %203 = vxpose.xlu0.b32.cont [10/16] 0.0, 128
    %204 = vxpose.xlu0.b32.cont [11/16] 0.0, 128
    %205 = vxpose.xlu0.b32.cont [12/16] 0.0, 128
    %206 = vxpose.xlu0.b32.cont [13/16] 0.0, 128
    %207 = vxpose.xlu0.b32.cont [14/16] 0.0, 128
    %208 = vxpose.xlu0.b32.cont [15/16] 0.0, 128
    %209 = vxpose.xlu0.b32.end [16/16] 0.0, 128
    %v210 = vpop.trf.xlu0
    %v211 = vpop.trf.xlu0
    %v212 = vpop.trf.xlu0
    %v213 = vpop.trf.xlu0
    %v214 = vpop.trf.xlu0
    %v215 = vpop.trf.xlu0
    %v216 = vpop.trf.xlu0
    %v217 = vpop.trf.xlu0
    %v218 = vpop.trf.xlu0
    %v219 = vpop.trf.xlu0
    %v220 = vpop.trf.xlu0
    %v221 = vpop.trf.xlu0
    %v222 = vpop.trf.xlu0
    %v223 = vpop.trf.xlu0
    %v224 = vpop.trf.xlu0
    %v225 = vpop.trf.xlu0
    %v226 = vmul.f32 %v210, 0.00390625
    %v227 = vld [vmem:[%s2] sm:$0xff]
    %v228 = vld [vmem:[%s2 + $0x8] sm:$0x1]
    %v229 = vld [vmem:[%s2 + $0x10] sm:$0x1]
    %v230 = vld [vmem:[%s2 + $0x18] sm:$0xff]
    %v231 = vld [vmem:[%s2 + $0x20] sm:$0xff]
    %v232 = vld [vmem:[%s2 + $0x28] sm:$0xff]
    %v233 = vld [vmem:[%s2 + $0x30] sm:$0xff]
    %v234 = vld [vmem:[%s2 + $0x38] sm:$0xff]
    %v235 = vld [vmem:[%s2 + $0x40] sm:$0xff]
    %v236 = vld [vmem:[%s2 + $0x48] sm:$0xff]
    %v237 = vld [vmem:[%s2 + $0x50] sm:$0xff]
    %v238 = vld [vmem:[%s2 + $0x58] sm:$0xff]
    %v239 = vld [vmem:[%s2 + $0x60] sm:$0xff]
    %v240 = vld [vmem:[%s2 + $0x68] sm:$0xff]
    %v241 = vld [vmem:[%s2 + $0x70] sm:$0xff]
    %v242 = vld [vmem:[%s2 + $0x78] sm:$0xff]
    %v243 = vld [vmem:[%s2 + $0x80] sm:$0xff]
    %v244 = vld [vmem:[%s2 + $0x88] sm:$0xff]
    %v245 = vld [vmem:[%s2 + $0x90] sm:$0xff]
    %v246 = vlaneseq
    %v247 = vshrl.u32 %v246, 7
    %v248 = vsub.s32 0, %v247
    %v249 = vrot.slane %v228, %v248
    %vm250 = vcmask 64512
    %v252 = vsel %vm250, %v226, 0
    %254 = vmatprep.subr.mxu0 0.0
    %255 = vmatpush1.msra.mxu0 %v227
    %256 = vmatprep.subr.mxu0 0.0
    %257 = vmatpush1.msra.mxu0 0.0
    %258 = vmatprep.subr.mxu0 0.0
    %259 = vmatpush1.msra.mxu0 0.0
    %260 = vmatprep.subr.mxu0 0.0
    %261 = vmatpush1.msra.mxu0 0.0
    %262 = vmatprep.subr.mxu0 0.0
    %263 = vmatpush1.msra.mxu0 0.0
    %264 = vmatprep.subr.mxu0 0.0
    %265 = vmatpush1.msra.mxu0 0.0
    %266 = vmatprep.subr.mxu0 0.0
    %267 = vmatpush1.msra.mxu0 0.0
    %268 = vmatprep.subr.mxu0 0.0
    %269 = vmatpush1.msra.mxu0 0.0
    %270 = vmatprep.subr.mxu0 0.0
    %271 = vmatpush1.msra.mxu0 0.0
    %272 = vmatprep.subr.mxu0 0.0
    %273 = vmatpush1.msra.mxu0 0.0
    %274 = vmatprep.subr.mxu0 0.0
    %275 = vmatpush1.msra.mxu0 0.0
    %276 = vmatprep.subr.mxu0 0.0
    %277 = vmatpush1.msra.mxu0 0.0
    %278 = vmatprep.subr.mxu0 0.0
    %279 = vmatpush1.msra.mxu0 0.0
    %280 = vmatprep.subr.mxu0 0.0
    %281 = vmatpush1.msra.mxu0 0.0
    %282 = vmatprep.subr.mxu0 0.0
    %283 = vmatpush1.msra.mxu0 0.0
    %284 = vmatprep.subr.mxu0 0.0
    %285 = vmatpush1.msra.mxu0 0.0
    %286 = vmatprep.subr.mxu0 0.0
    %287 = vmatpush1.msra.mxu0 0.0
    %288 = vmatprep.subr.mxu0 0.0
    %289 = vmatpush1.msra.mxu0 0.0
    %290 = vmatprep.subr.mxu0 0.0
    %291 = vmatpush1.msra.mxu0 0.0
    %292 = vmatprep.subr.mxu0 0.0
    %293 = vmatpush1.msra.mxu0 0.0
    %294 = vmatprep.subr.mxu0 0.0
    %295 = vmatpush1.msra.mxu0 0.0
    %296 = vmatprep.subr.mxu0 0.0
    %297 = vmatpush1.msra.mxu0 0.0
    %298 = vmatprep.subr.mxu0 0.0
    %299 = vmatpush1.msra.mxu0 0.0
    %300 = vmatprep.subr.mxu0 0.0
    %301 = vmatpush1.msra.mxu0 0.0
    %302 = vmatprep.subr.mxu0 0.0
    %303 = vmatpush1.msra.mxu0 0.0
    %304 = vmatprep.subr.mxu0 0.0
    %305 = vmatpush1.msra.mxu0 0.0
    %306 = vmatprep.subr.mxu0 0.0
    %307 = vmatpush1.msra.mxu0 0.0
    %308 = vmatprep.subr.mxu0 0.0
    %309 = vmatpush1.msra.mxu0 0.0
    %310 = vmatprep.subr.mxu0 0.0
    %311 = vmatpush1.msra.mxu0 0.0
    %312 = vmatprep.subr.mxu0 0.0
    %313 = vmatpush1.msra.mxu0 0.0
    %314 = vmatprep.subr.mxu0 0.0
    %315 = vmatpush1.msra.mxu0 0.0
    %316 = vmatprep.subr.mxu0 0.0
    %317 = vmatpush1.msra.mxu0 0.0
    %318 = vmatprep.mubr.f32.mxu0 0.0
    %319 = vmatmul.mubr.f32.gmra.mrb[0].mxu0 %v252
    %v320 = vpop.f32.mrb[0].mxu0
    %v321 = vadd.f32 %v249, %v320
    %v322 = vpop.f32.mrb[0].mxu0
    %323 = vdwg.mxu0
    %v324 = vmax.f32 %v321, 0.0
    %v325 = vlaneseq
    %v326 = vshrl.u32 %v325, 7
    %v327 = vsub.s32 0, %v326
    %v328 = vrot.slane %v229, %v327
    %329 = vmatprep.subr.mxu0 0.0
    %330 = vmatpush1.msra.mxu0 %v230
    %331 = vmatprep.subr.mxu0 0.0
    %332 = vmatpush1.msra.mxu0 %v231
    %333 = vmatprep.subr.mxu0 0.0
    %334 = vmatpush1.msra.mxu0 %v232
    %335 = vmatprep.subr.mxu0 0.0
    %336 = vmatpush1.msra.mxu0 %v233
    %337 = vmatprep.subr.mxu0 0.0
    %338 = vmatpush1.msra.mxu0 %v234
    %339 = vmatprep.subr.mxu0 0.0
    %340 = vmatpush1.msra.mxu0 %v235
    %341 = vmatprep.subr.mxu0 0.0
    %342 = vmatpush1.msra.mxu0 %v236
    %343 = vmatprep.subr.mxu0 0.0
    %344 = vmatpush1.msra.mxu0 %v237
    %345 = vmatprep.subr.mxu0 0.0
    %346 = vmatpush1.msra.mxu0 %v238
    %347 = vmatprep.subr.mxu0 0.0
    %348 = vmatpush1.msra.mxu0 %v239
    %349 = vmatprep.subr.mxu0 0.0
    %350 = vmatpush1.msra.mxu0 %v240
    %351 = vmatprep.subr.mxu0 0.0
    %352 = vmatpush1.msra.mxu0 %v241
    %353 = vmatprep.subr.mxu0 0.0
    %354 = vmatpush1.msra.mxu0 %v242
    %355 = vmatprep.subr.mxu0 0.0
    %356 = vmatpush1.msra.mxu0 %v243
    %357 = vmatprep.subr.mxu0 0.0
    %358 = vmatpush1.msra.mxu0 %v244
    %359 = vmatprep.subr.mxu0 0.0
    %360 = vmatpush1.msra.mxu0 %v245
    %361 = vmatprep.subr.mxu0 0.0
    %362 = vmatpush1.msra.mxu0 0.0
    %363 = vmatprep.subr.mxu0 0.0
    %364 = vmatpush1.msra.mxu0 0.0
    %365 = vmatprep.subr.mxu0 0.0
    %366 = vmatpush1.msra.mxu0 0.0
    %367 = vmatprep.subr.mxu0 0.0
    %368 = vmatpush1.msra.mxu0 0.0
    %369 = vmatprep.subr.mxu0 0.0
    %370 = vmatpush1.msra.mxu0 0.0
    %371 = vmatprep.subr.mxu0 0.0
    %372 = vmatpush1.msra.mxu0 0.0
    %373 = vmatprep.subr.mxu0 0.0
    %374 = vmatpush1.msra.mxu0 0.0
    %375 = vmatprep.subr.mxu0 0.0
    %376 = vmatpush1.msra.mxu0 0.0
    %377 = vmatprep.subr.mxu0 0.0
    %378 = vmatpush1.msra.mxu0 0.0
    %379 = vmatprep.subr.mxu0 0.0
    %380 = vmatpush1.msra.mxu0 0.0
    %381 = vmatprep.subr.mxu0 0.0
    %382 = vmatpush1.msra.mxu0 0.0
    %383 = vmatprep.subr.mxu0 0.0
    %384 = vmatpush1.msra.mxu0 0.0
    %385 = vmatprep.subr.mxu0 0.0
    %386 = vmatpush1.msra.mxu0 0.0
    %387 = vmatprep.subr.mxu0 0.0
    %388 = vmatpush1.msra.mxu0 0.0
    %389 = vmatprep.subr.mxu0 0.0
    %390 = vmatpush1.msra.mxu0 0.0
    %391 = vmatprep.subr.mxu0 0.0
    %392 = vmatpush1.msra.mxu0 0.0
    %393 = vmatprep.mubr.f32.mxu0 0.0
    %394 = vmatmul.mubr.f32.gmra.mrb[0].mxu0 %v324
    %v395 = vpop.f32.mrb[0].mxu0
    %v396 = vadd.f32 %v328, %v395
    %v397 = vpop.f32.mrb[0].mxu0
    %398 = vdwg.mxu0
    %399 = vst [vmem:[#allocation2] sm:$0x3] %v396
    // Predicated region
    $region14: #{combined_forward.1} parent=1 // pred_check
      _
    $region15: #{combined_forward.1} parent=1 // pred_check_branch
      %401 = sbr.rel (0) target = $region17
    $region16: #{combined_forward.1} parent=1 // pred_region
      %s403 = ssub.s32 32, 32
      %404 = vsyncadd [#allocation3], %s403
      %s406 = sshll.u32 [#allocation2], 4
      %s407 = int_to_ptr.vmem [resolvable:$true] %s406
      %409 = dma.vmem_to_hbm [thread:$0]  %s407, 32, %s3, [#allocation3]
    $region17: #{combined_forward.1} parent=1 // pred_fallthru
      _
    // Predicated region
    $region18: #{combined_forward.1} parent=1 // pred_check
      _
    $region19: #{combined_forward.1} parent=1 // pred_check_branch
      %411 = sbr.rel (0) target = $region21
    $region20: #{combined_forward.1} parent=1 // pred_region
      %412 = dma.done [#allocation3], 32
    $region21: #{combined_forward.1} parent=1 // pred_fallthru
      _
    %413 = vsyncpa [#allocation3], 1

</llo_original>
